<compile_context>
chip_gen: v7x
topology: tpu7x:2x2x1
jax: 0.10.0
libtpu: 0.0.40
codegen_flags: <defaults>
</compile_context>

<pallas_src>
import functools

import jax
import jax.numpy as jnp
from jax.experimental import pallas as pl
from jax.experimental.pallas import tpu as pltpu

_LANES = 128


def _round_up(x, m):
    return ((x + m - 1) // m) * m


def _cdiv(a, b):
    return -(-a // b)


def _sublane_multiple(dtype):
    # f32 -> 8, bf16 -> 16, int8/fp8 -> 32 (second-to-last block dim).
    return max(8, 32 // jnp.dtype(dtype).itemsize)


def _vmem_capacity_bytes():
    try:
        return int(pltpu.get_tpu_info().vmem_capacity_bytes)
    except Exception:
        return 64 << 20  # conservative: v7x per-TensorCore VMEM


def _bexp_rmse_ref(y_pre, y_true):
    """Pure-JAX reference mirroring the PyTorch forward exactly."""
    y_pre = y_pre.astype(jnp.float32)
    y_true = y_true.astype(jnp.float32)
    weight = jnp.exp(y_true * 6.0) - 0.8
    n = y_true.size
    loss = jnp.sum((y_pre - y_true) ** 2 * weight / n)
    return jnp.sqrt(loss)


def _bexp_rmse_kernel(y_pre_ref, y_true_ref, out_ref, *, rows, tr):
    p = pl.program_id(0)
    s = pl.program_id(1)
    steps = pl.num_programs(1)
    gb = p * steps + s                 # intended (unclamped) global block idx
    row0 = gb * tr

    y_true = y_true_ref[...].astype(jnp.float32)
    y_pre = y_pre_ref[...].astype(jnp.float32)

    w = jnp.exp(y_true * 6.0) - 0.8    # transcendental -> EUP slot
    d = y_pre - y_true
    term = w * d * d                   # pure VPU elementwise

    # Mask rows past the logical end (ragged last block / clamped surplus
    # steps).  Select (not multiply) so inf/nan from garbage rows is dropped.
    local_row = jax.lax.broadcasted_iota(jnp.int32, term.shape, 0)
    term = jnp.where(row0 + local_row < rows, term, 0.0)

    # Reduce the tile to one (8, 128) vreg: vreg-wise VPU adds only; no
    # full-tile accumulator load/store per step.
    partial = jnp.sum(term.reshape(-1, 8, _LANES), axis=0)

    @pl.when(s == 0)
    def _():
        out_ref[0] = partial           # direct init: no zero-store + reload

    @pl.when(s != 0)
    def _():
        out_ref[0] += partial


def bexp_rmse_loss(y_pre, y_true, *, block_rows=None, min_pallas_elems=65536,
                   min_rows_per_core=1024):
    """sqrt( sum( (y_pre - y_true)^2 * (exp(6*y_true) - 0.8) ) / N )."""
    assert y_pre.shape == y_true.shape
    # TODO(synk): the PyTorch runtime asserts (0 <= y_true <= 1) are host-side
    # input validation only and are not replicated on-device.

    total = 1
    for dim in y_true.shape:
        total *= int(dim)

    sub = max(_sublane_multiple(y_pre.dtype), _sublane_multiple(y_true.dtype))
    itemsize = max(jnp.dtype(y_pre.dtype).itemsize,
                   jnp.dtype(y_true.dtype).itemsize)
    rows = _cdiv(total, _LANES)

    if total < min_pallas_elems or rows < sub:
        # Tiny tensors: fused XLA beats kernel launch + reshape overhead.
        return _bexp_rmse_ref(y_pre, y_true)

    vmem_cap = _vmem_capacity_bytes()
    if block_rows is None:
        # Budget ~1/4 of VMEM for the 2x double-buffered input tiles (rest is
        # headroom for f32 temporaries): ~8192 rows on v7x, ~16384 on v5e/v6e.
        block_rows = max(1024, min(16384, vmem_cap // (16 * _LANES * 4)))

    # Engage a 2nd TensorCore partition (v7x) as soon as each core gets
    # >= min_rows_per_core rows of work; harmless on 1-TC chips.
    n_par = 2 if rows >= 2 * min_rows_per_core else 1

    tr = _round_up(min(int(block_rows), _cdiv(rows, n_par)), sub)
    tr = min(tr, (rows // sub) * sub)        # keep block <= array rows
    blocks = _cdiv(rows, tr)
    steps = _cdiv(blocks, n_par)

    # Pad the flat array only to the next 128-lane multiple (<=127 zeros, no
    # copy at all when total % 128 == 0) -- no full tile-multiple padding copy.
    def to_lane_dense(x):
        x = jnp.ravel(x)
        pad = rows * _LANES - total
        if pad:
            x = jnp.pad(x, (0, pad))
        return x.reshape(rows, _LANES)

    y_pre2 = to_lane_dense(y_pre)
    y_true2 = to_lane_dense(y_true)

    def in_index_map(p, s):
        # Clamp so the (at most one) surplus step of an uneven partition split
        # stays in bounds; its rows are masked out inside the kernel.
        return (jnp.minimum(p * steps + s, blocks - 1), 0)

    kernel = functools.partial(_bexp_rmse_kernel, rows=rows, tr=tr)

    in_tile_bytes = tr * _LANES * itemsize
    vmem_limit = int(min(
        (vmem_cap * 3) // 4,
        max(32 << 20, 4 * in_tile_bytes + 4 * tr * _LANES * 4 + (2 << 20)),
    ))

    cost = pl.CostEstimate(
        flops=6 * total,                # mul, sub, sub, mul, mul, add / elem
        transcendentals=total,          # one exp per element
        bytes_accessed=(2 * n_par * steps * tr * _LANES * itemsize
                        + n_par * 8 * _LANES * 4),
    )

    partials = pl.pallas_call(
        kernel,
        out_shape=jax.ShapeDtypeStruct((n_par, 8, _LANES), jnp.float32),
        grid=(n_par, steps),
        in_specs=[
            pl.BlockSpec((tr, _LANES), in_index_map),
            pl.BlockSpec((tr, _LANES), in_index_map),
        ],
        out_specs=pl.BlockSpec((1, 8, _LANES), lambda p, s: (p, 0, 0)),
        compiler_params=pltpu.CompilerParams(
            dimension_semantics=("parallel", "arbitrary"),
            vmem_limit_bytes=vmem_limit,
        ),
        cost_estimate=cost,
    )(y_pre2, y_true2)

    return jnp.sqrt(jnp.sum(partials) * (1.0 / float(total)))


if __name__ == "__main__":
    # Small shapes consistent with the module: (batch, seq, height, width).
    B, S, H, W = 2, 8, 16, 16
    key = jax.random.PRNGKey(0)
    k1, k2, k3, k4 = jax.random.split(key, 4)
    # y_true must lie in [0, 1] (module asserts this).
    y_true = jax.random.uniform(k1, (B, S, H, W), dtype=jnp.float32,
                                minval=0.0, maxval=1.0)
    y_pre = jax.random.uniform(k2, (B, S, H, W), dtype=jnp.float32,
                               minval=0.0, maxval=1.0)

    ref = jax.block_until_ready(_bexp_rmse_ref(y_pre, y_true))

    # 1) Pallas path forced (single auto-sized tile, one grid step).
    loss = jax.block_until_ready(
        bexp_rmse_loss(y_pre, y_true, min_pallas_elems=0))
    assert jnp.allclose(loss, ref, rtol=1e-4, atol=1e-5), (loss, ref)

    # 2) Tiny tiles + forced 2-partition split: multi-step accumulation and
    #    the "parallel" partition axis.
    loss2 = jax.block_until_ready(
        bexp_rmse_loss(y_pre, y_true, block_rows=8, min_pallas_elems=0,
                       min_rows_per_core=8))
    assert jnp.allclose(loss2, ref, rtol=1e-4, atol=1e-5), (loss2, ref)

    # 3) Ragged shape (2520 elems): host pad to the next 128-lane multiple,
    #    in-kernel row-tail mask, and a clamped fully-out-of-range surplus
    #    step on the second partition.
    shp = (2, 4, 15, 21)
    yt = jax.random.uniform(k3, shp, dtype=jnp.float32, minval=0.0, maxval=1.0)
    yp = jax.random.uniform(k4, shp, dtype=jnp.float32, minval=0.0, maxval=1.0)
    ref3 = jax.block_until_ready(_bexp_rmse_ref(yp, yt))
    loss3 = jax.block_until_ready(
        bexp_rmse_loss(yp, yt, block_rows=8, min_pallas_elems=0,
                       min_rows_per_core=4))
    assert jnp.allclose(loss3, ref3, rtol=1e-4, atol=1e-5), (loss3, ref3)

    # 4) Default auto path: tiny input takes the fused pure-JAX fast path.
    loss4 = jax.block_until_ready(bexp_rmse_loss(y_pre, y_true))
    assert jnp.allclose(loss4, ref, rtol=1e-4, atol=1e-5), (loss4, ref)

    print("KERNEL_OK")
</pallas_src>

<mosaic_0001>
module attributes {stable_mosaic.version = 11 : i64} {
  func.func @_bexp_rmse_kernel(%arg0: i32, %arg1: i32, %arg2: memref<32x128xf32, #tpu.memory_space<vmem>>, %arg3: memref<32x128xf32, #tpu.memory_space<vmem>>, %arg4: memref<1x8x128xf32, #tpu.memory_space<vmem>>) attributes {dimension_semantics = [#tpu.dimension_semantics<parallel>, #tpu.dimension_semantics<arbitrary>], iteration_bounds = array<i64: 1, 1>, scalar_prefetch = 0 : i64, scratch_operands = 0 : i64, tpu.core_type = #tpu.core_type<tc>, window_params = [{transform_indices = @transform_0, window_bounds = array<i64: 32, 128>}, {transform_indices = @transform_1, window_bounds = array<i64: 32, 128>}, {transform_indices = @transform_2, window_bounds = array<i64: 1, 8, 128>}]} {
    %c1_i32 = arith.constant 1 : i32
    %0 = arith.muli %arg0, %c1_i32 : i32
    %1 = arith.addi %0, %arg1 : i32
    %c32_i32 = arith.constant 32 : i32
    %2 = arith.muli %1, %c32_i32 : i32
    %c0 = arith.constant 0 : index
    %c0_0 = arith.constant 0 : index
    %3 = vector.load %arg3[%c0, %c0_0] : memref<32x128xf32, #tpu.memory_space<vmem>>, vector<32x128xf32>
    %c0_1 = arith.constant 0 : index
    %c0_2 = arith.constant 0 : index
    %4 = vector.load %arg2[%c0_1, %c0_2] : memref<32x128xf32, #tpu.memory_space<vmem>>, vector<32x128xf32>
    %cst = arith.constant 6.000000e+00 : f32
    %5 = vector.broadcast %cst : f32 to vector<32x128xf32>
    %6 = arith.mulf %3, %5 : vector<32x128xf32>
    %7 = math.exp %6 : vector<32x128xf32>
    %cst_3 = arith.constant 8.000000e-01 : f32
    %8 = vector.broadcast %cst_3 : f32 to vector<32x128xf32>
    %9 = arith.subf %7, %8 : vector<32x128xf32>
    %10 = arith.subf %4, %3 : vector<32x128xf32>
    %11 = arith.mulf %9, %10 : vector<32x128xf32>
    %12 = arith.mulf %11, %10 : vector<32x128xf32>
    %13 = tpu.iota {dimensions = array<i32: 0>} : vector<32x128xi32>
    %14 = vector.broadcast %2 : i32 to vector<32x128xi32>
    %15 = arith.addi %14, %13 : vector<32x128xi32>
    %c32_i32_4 = arith.constant 32 : i32
    %16 = vector.broadcast %c32_i32_4 : i32 to vector<32x128xi32>
    %17 = arith.cmpi slt, %15, %16 : vector<32x128xi32>
    %cst_5 = arith.constant 0.000000e+00 : f32
    %18 = vector.broadcast %cst_5 : f32 to vector<32x128xf32>
    %19 = arith.select %17, %12, %18 : vector<32x128xi1>, vector<32x128xf32>
    %20 = vector.shape_cast %19 : vector<32x128xf32> to vector<4x8x128xf32>
    %cst_6 = arith.constant dense<0.000000e+00> : vector<8x128xf32>
    %21 = vector.multi_reduction <add>, %20, %cst_6 [0] : vector<4x8x128xf32> to vector<8x128xf32>
    %c0_i32 = arith.constant 0 : i32
    %22 = arith.cmpi eq, %arg1, %c0_i32 : i32
    %23 = arith.extui %22 : i1 to i32
    %c0_i32_7 = arith.constant 0 : i32
    %24 = arith.cmpi ne, %23, %c0_i32_7 : i32
    scf.if %24 {
      %c0_10 = arith.constant 0 : index
      %c0_11 = arith.constant 0 : index
      %c0_12 = arith.constant 0 : index
      %28 = vector.load %arg4[%c0_10, %c0_11, %c0_12] : memref<1x8x128xf32, #tpu.memory_space<vmem>>, vector<1x8x128xf32>
      %29 = vector.shape_cast %28 : vector<1x8x128xf32> to vector<8x128xf32>
      %30 = vector.shape_cast %21 : vector<8x128xf32> to vector<1x8x128xf32>
      tpu.vector_store %arg4[%c0_10, %c0_11, %c0_12], %30 {strides = array<i32>} : memref<1x8x128xf32, #tpu.memory_space<vmem>>, vector<1x8x128xf32>,
    } else {
    }
    %c0_i32_8 = arith.constant 0 : i32
    %25 = arith.cmpi ne, %arg1, %c0_i32_8 : i32
    %26 = arith.extui %25 : i1 to i32
    %c0_i32_9 = arith.constant 0 : i32
    %27 = arith.cmpi ne, %26, %c0_i32_9 : i32
    scf.if %27 {
      %c0_10 = arith.constant 0 : index
      %c0_11 = arith.constant 0 : index
      %c0_12 = arith.constant 0 : index
      %28 = vector.load %arg4[%c0_10, %c0_11, %c0_12] : memref<1x8x128xf32, #tpu.memory_space<vmem>>, vector<1x8x128xf32>
      %29 = vector.shape_cast %28 : vector<1x8x128xf32> to vector<8x128xf32>
      %30 = arith.addf %29, %21 : vector<8x128xf32>
      %c0_13 = arith.constant 0 : index
      %c0_14 = arith.constant 0 : index
      %c0_15 = arith.constant 0 : index
      %31 = vector.load %arg4[%c0_13, %c0_14, %c0_15] : memref<1x8x128xf32, #tpu.memory_space<vmem>>, vector<1x8x128xf32>
      %32 = vector.shape_cast %31 : vector<1x8x128xf32> to vector<8x128xf32>
      %33 = vector.shape_cast %30 : vector<8x128xf32> to vector<1x8x128xf32>
      tpu.vector_store %arg4[%c0_13, %c0_14, %c0_15], %33 {strides = array<i32>} : memref<1x8x128xf32, #tpu.memory_space<vmem>>, vector<1x8x128xf32>,
    } else {
    }
    return
  }
  func.func @transform_0(%arg0: i32, %arg1: i32) -> (i32, i32) {
    %c1_i32 = arith.constant 1 : i32
    %0 = arith.muli %arg0, %c1_i32 : i32
    %1 = arith.addi %0, %arg1 : i32
    %c0_i32 = arith.constant 0 : i32
    %2 = arith.minsi %1, %c0_i32 : i32
    %c0_i32_0 = arith.constant 0 : i32
    %c0_i32_1 = arith.constant 0 : i32
    return %2, %c0_i32_0 : i32, i32
  }
  func.func @transform_1(%arg0: i32, %arg1: i32) -> (i32, i32) {
    %c1_i32 = arith.constant 1 : i32
    %0 = arith.muli %arg0, %c1_i32 : i32
    %1 = arith.addi %0, %arg1 : i32
    %c0_i32 = arith.constant 0 : i32
    %2 = arith.minsi %1, %c0_i32 : i32
    %c0_i32_0 = arith.constant 0 : i32
    %c0_i32_1 = arith.constant 0 : i32
    return %2, %c0_i32_0 : i32, i32
  }
  func.func @transform_2(%arg0: i32, %arg1: i32) -> (i32, i32, i32) {
    %c0_i32 = arith.constant 0 : i32
    %c0_i32_0 = arith.constant 0 : i32
    %c0_i32_1 = arith.constant 0 : i32
    return %arg0, %c0_i32, %c0_i32_0 : i32, i32, i32
  }
}

</mosaic_0001>

<llo_original>
// kernel: tpu_custom_call.1
$region0: #{tpu_custom_call.1}
  #allocation0 [shape = 'u32[]', space=smem, size = 0x4, offset = 0x4, fixed_abs, tag = 'smem constant byte address 0x4 - core index']
  #allocation1 [shape = 'u32[144,128]{1,0:T(1,128)}', space=vmem, size = 0x12000, scoped, tag = 'internal scratch']
  %s0 = inlined_call_operand.hbm [shape: f32[32,128], index: 0, kind: input, shape index: {}]
  %s1 = inlined_call_operand.hbm [shape: f32[32,128], index: 1, kind: input, shape index: {}]
  %s2 = inlined_call_operand.hbm [shape: f32[1,8,128], index: 2, kind: output, shape index: {}]
  %s3 = sld [smem:[#allocation0]]
  $region34: #{tpu_custom_call.1} parent=0
    _
  %s5 = ssub.s32 1, %s3
  %s6 = scalar_select 0, %s5, %s3
  $region1: #{tpu_custom_call.1} parent=0
    #allocation2 [shape = 'u8[16384]{0}', space=vmem, size = 0x4000, scoped, tag = 'input window, operand 0, single buffered']
    #allocation3 [shape = 's32[1]{0}', space=sflag, size = 0x4, scoped, tag = 'scoped memory for tpu_custom_call.1']
    #allocation4 [shape = 's32[1]{0}', space=sflag, size = 0x4, scoped, tag = 'scoped memory for tpu_custom_call.1']
    #allocation5 [shape = 'u8[16384]{0}', space=vmem, size = 0x4000, scoped, tag = 'input window, operand 1, single buffered']
    #allocation6 [shape = 's32[1]{0}', space=sflag, size = 0x4, scoped, tag = 'scoped memory for tpu_custom_call.1']
    #allocation7 [shape = 'u8[4096]{0}', space=vmem, size = 0x1000, scoped, tag = 'output window, operand 0, single buffered']
    %7 = vsyncpa [#allocation3], 0
    %8 = vsyncpa [#allocation6], 0
    %9 = vsyncpa [#allocation4], 0
    // Predicated region
    $region2: #{tpu_custom_call.1} parent=1 // pred_check
      _
    $region3: #{tpu_custom_call.1} parent=1 // pred_check_branch
      %11 = sbr.rel (0) target = $region5
    $region4: #{tpu_custom_call.1} parent=1 // pred_region
      %s12 = sadd.s32 0, 0
      %p13 = scmp.lt.s32.totalorder %s12, 0
      %s14 = scalar_select %p13, %s12, 0
      %s15 = smul.u32 4, %s14
      %s17 = ssub.s32 512, 512
      %18 = vsyncadd [#allocation3], %s17
      %s19 = smul.addr %s15, 128
      %s20 = scalar_lea.hbm %s0, %s19
      %s21 = sshll.u32 [#allocation2], 4
      %s22 = int_to_ptr.vmem [resolvable:$true] %s21
      %27 = dma.hbm_to_vmem [thread:$0]  %s20, 512, %s22, [#allocation3], 128, 128, 8
    $region5: #{tpu_custom_call.1} parent=1 // pred_fallthru
      _
    // Predicated region
    $region6: #{tpu_custom_call.1} parent=1 // pred_check
      _
    $region7: #{tpu_custom_call.1} parent=1 // pred_check_branch
      %29 = sbr.rel (0) target = $region9
    $region8: #{tpu_custom_call.1} parent=1 // pred_region
      %s30 = sadd.s32 0, 0
      %p31 = scmp.lt.s32.totalorder %s30, 0
      %s32 = scalar_select %p31, %s30, 0
      %s33 = smul.u32 4, %s32
      %s35 = ssub.s32 512, 512
      %36 = vsyncadd [#allocation6], %s35
      %s37 = smul.addr %s33, 128
      %s38 = scalar_lea.hbm %s1, %s37
      %s39 = sshll.u32 [#allocation5], 4
      %s40 = int_to_ptr.vmem [resolvable:$true] %s39
      %45 = dma.hbm_to_vmem [thread:$0]  %s38, 512, %s40, [#allocation6], 128, 128, 8
    $region9: #{tpu_custom_call.1} parent=1 // pred_fallthru
      _
    // Predicated region
    $region10: #{tpu_custom_call.1} parent=1 // pred_check
      _
    $region11: #{tpu_custom_call.1} parent=1 // pred_check_branch
      %47 = sbr.rel (0) target = $region13
    $region12: #{tpu_custom_call.1} parent=1 // pred_region
      %48 = dma.done [#allocation3], 512
    $region13: #{tpu_custom_call.1} parent=1 // pred_fallthru
      _
    // Predicated region
    $region14: #{tpu_custom_call.1} parent=1 // pred_check
      _
    $region15: #{tpu_custom_call.1} parent=1 // pred_check_branch
      %50 = sbr.rel (0) target = $region17
    $region16: #{tpu_custom_call.1} parent=1 // pred_region
      %51 = dma.done [#allocation6], 512
    $region17: #{tpu_custom_call.1} parent=1 // pred_fallthru
      _
    %s52 = sadd.s32 0, 0
    %p53 = scmp.lt.s32.totalorder %s52, 0
    %s54 = scalar_select %p53, %s52, 0
    %s55 = smul.u32 4, %s54
    %s56 = sadd.s32 0, 0
    %p57 = scmp.lt.s32.totalorder %s56, 0
    %s58 = scalar_select %p57, %s56, 0
    %s59 = smul.u32 4, %s58
    %s60 = sadd.s32 0, 0
    %s61 = smul.u32 %s60, 32
    %v62 = vld [vmem:[#allocation5] sm:$0xff]
    %v63 = vld [vmem:[#allocation5 + $0x8] sm:$0xff]
    %v64 = vld [vmem:[#allocation5 + $0x10] sm:$0xff]
    %v65 = vld [vmem:[#allocation5 + $0x18] sm:$0xff]
    %v66 = vld [vmem:[#allocation2] sm:$0xff]
    %v67 = vld [vmem:[#allocation2 + $0x8] sm:$0xff]
    %v68 = vld [vmem:[#allocation2 + $0x10] sm:$0xff]
    %v69 = vld [vmem:[#allocation2 + $0x18] sm:$0xff]
    %v70 = vmul.f32 %v62, 6.0
    %v71 = vmul.f32 %v63, 6.0
    %v72 = vmul.f32 %v64, 6.0
    %v73 = vmul.f32 %v65, 6.0
    %v74 = vmul.f32 %v70, 1.442695
    %v75 = vpow.pop %v74
    %v76 = vmul.f32 %v71, 1.442695
    %v77 = vpow.pop %v76
    %v78 = vmul.f32 %v72, 1.442695
    %v79 = vpow.pop %v78
    %v80 = vmul.f32 %v73, 1.442695
    %v81 = vpow.pop %v80
    %v82 = vsub.f32 %v75, 0.8
    %v83 = vsub.f32 %v77, 0.8
    %v84 = vsub.f32 %v79, 0.8
    %v85 = vsub.f32 %v81, 0.8
    %v86 = vsub.f32 %v66, %v62
    %v87 = vsub.f32 %v67, %v63
    %v88 = vsub.f32 %v68, %v64
    %v89 = vsub.f32 %v69, %v65
    %v90 = vmul.f32 %v82, %v86
    %v91 = vmul.f32 %v83, %v87
    %v92 = vmul.f32 %v84, %v88
    %v93 = vmul.f32 %v85, %v89
    %v94 = vmul.f32 %v90, %v86
    %v95 = vmul.f32 %v91, %v87
    %v96 = vmul.f32 %v92, %v88
    %v97 = vmul.f32 %v93, %v89
    %v98 = vlaneseq
    %v99 = vshrl.u32 %v98, 7
    %v100 = vadd.s32 %v99, 8
    %v101 = vadd.s32 %v99, 16
    %v102 = vadd.s32 %v99, 24
    %v103 = vstv %s61
    %v104 = vadd.s32 %v103, %v99
    %v105 = vadd.s32 %v103, %v100
    %v106 = vadd.s32 %v103, %v101
    %v107 = vadd.s32 %v103, %v102
    %vm108 = vcmp.lt.s32.totalorder %v104, 32
    %vm109 = vcmp.lt.s32.totalorder %v105, 32
    %vm110 = vcmp.lt.s32.totalorder %v106, 32
    %vm111 = vcmp.lt.s32.totalorder %v107, 32
    %v112 = vsel %vm108, %v94, 0.0
    %v113 = vsel %vm109, %v95, 0.0
    %v114 = vsel %vm110, %v96, 0.0
    %v115 = vsel %vm111, %v97, 0.0
    %v116 = vadd.f32 %v112, %v113
    %v117 = vadd.f32 %v116, %v114
    %v118 = vadd.f32 %v117, %v115
    %p119 = scmp.eq.s32.totalorder 0, 0
    // Predicated region
    $region18: #{tpu_custom_call.1} parent=1 // pred_check
      %p120 = pneg %p119
    $region19: #{tpu_custom_call.1} parent=1 // pred_check_branch
      %122 = sbr.rel (%p120) target = $region21
    $region20: #{tpu_custom_call.1} parent=1 // pred_region
      %123 = vst [vmem:[#allocation7] sm:$0xff] %v118
    $region21: #{tpu_custom_call.1} parent=1 // pred_fallthru
      _
    %p124 = scmp.ne.s32.totalorder 0, 0
    // Predicated region
    $region22: #{tpu_custom_call.1} parent=1 // pred_check
      %p125 = pneg %p124
    $region23: #{tpu_custom_call.1} parent=1 // pred_check_branch
      %127 = sbr.rel (%p125) target = $region25
    $region24: #{tpu_custom_call.1} parent=1 // pred_region
      %v128 = vld [vmem:[#allocation7] sm:$0xff]
      %v129 = vadd.f32 %v128, %v118
      %130 = vst [vmem:[#allocation7] sm:$0xff] %v129
    $region25: #{tpu_custom_call.1} parent=1 // pred_fallthru
      _
    // Predicated region
    $region26: #{tpu_custom_call.1} parent=1 // pred_check
      _
    $region27: #{tpu_custom_call.1} parent=1 // pred_check_branch
      %132 = sbr.rel (0) target = $region29
    $region28: #{tpu_custom_call.1} parent=1 // pred_region
      %s134 = ssub.s32 128, 128
      %135 = vsyncadd [#allocation4], %s134
      %s137 = sshll.u32 [#allocation7], 4
      %s138 = int_to_ptr.vmem [resolvable:$true] %s137
      %140 = dma.vmem_to_hbm [thread:$0]  %s138, 128, %s2, [#allocation4]
    $region29: #{tpu_custom_call.1} parent=1 // pred_fallthru
      _
    // Predicated region
    $region30: #{tpu_custom_call.1} parent=1 // pred_check
      _
    $region31: #{tpu_custom_call.1} parent=1 // pred_check_branch
      %142 = sbr.rel (0) target = $region33
    $region32: #{tpu_custom_call.1} parent=1 // pred_region
      %143 = dma.done [#allocation4], 128
    $region33: #{tpu_custom_call.1} parent=1 // pred_fallthru
      _
    %144 = vsyncpa [#allocation3], 1
    %145 = vsyncpa [#allocation6], 1
    %146 = vsyncpa [#allocation4], 1

</llo_original>
